<compile_context>
chip_gen: v7x
topology: tpu7x:2x2x1
jax: 0.10.0
libtpu: 0.0.40
codegen_flags: <defaults>
</compile_context>

<pallas_src>
import jax
import jax.numpy as jnp
from jax.experimental import pallas as pl
from jax.experimental.pallas import tpu as pltpu

IN_FEATURES = 7
HIDDEN1 = 128
HIDDEN2 = 64
NUM_CLASSES = 64
EPS = 1e-5


# -----------------------------------------------------------------------------
# Kernel: operates on "2-row packed" data. Each packed row holds two logical
# rows side by side; weights are block-diagonal duplicated, so
#   packed_row @ blockdiag(W, W) == concat(row_a @ W, row_b @ W)
# Bias add / ReLU are elementwise so they commute with the packing.
# -----------------------------------------------------------------------------
def fcnn_kernel(x_ref, w1_ref, b1_ref, w2_ref, b2_ref, w3_ref, b3_ref, o_ref):
    # ---- Layer 1: Linear(7,128) with BN folded in, + ReLU ----
    xb = x_ref[...].astype(jnp.bfloat16)
    h = jnp.dot(xb, w1_ref[...],
                preferred_element_type=jnp.float32) + b1_ref[...]
    h = jnp.maximum(h, 0.0)
    # Dropout(0.2): identity in eval mode.
    # TODO(synk): train-mode dropout (pltpu.prng_seed/prng_random_bits mask) not emitted.

    # ---- Layer 2: Linear(128,64) with BN folded in, + ReLU ----
    h = jnp.dot(h.astype(jnp.bfloat16), w2_ref[...],
                preferred_element_type=jnp.float32) + b2_ref[...]
    h = jnp.maximum(h, 0.0)
    # Dropout(0.2): identity in eval mode.

    # ---- Layer 3: Linear(64, num_classes) ----
    o_ref[...] = (jnp.dot(h.astype(jnp.bfloat16), w3_ref[...],
                          preferred_element_type=jnp.float32)
                  + b3_ref[...]).astype(o_ref.dtype)


# -----------------------------------------------------------------------------
# Wrapper
# -----------------------------------------------------------------------------
def _round_up(n, m):
    return ((n + m - 1) // m) * m


def fcnn_forward(x, packed, *, block_rows=8192, min_grid_steps=8,
                 out_dtype=jnp.bfloat16):
    """x: [B, 7] float32. packed: dict from fold_and_pack(). Returns [B, 64]."""
    B = x.shape[0]
    assert x.shape[1] == IN_FEATURES

    # Pad only to a multiple of 16 logical rows (needed for the 2-row packing
    # reshape). The ragged last grid block is handled by Pallas itself
    # (OOB input reads are garbage rows whose outputs are dropped; OOB output
    # writes are masked), so no full grid*br pad of the input.
    b16 = _round_up(max(B, 2), 16)
    if b16 != B:
        x = jnp.pad(x, ((0, b16 - B), (0, 0)))

    # 2-row packing: [b16, 7] -> [b16/2, 14]  (free row-major view)
    xp = x.reshape(b16 // 2, 2 * IN_FEATURES)
    R = b16 // 2  # packed rows

    # Tile size: as large as possible (amortize per-step overhead), but capped
    # so there are >= min_grid_steps grid steps -- with >=2 steps the
    # "parallel" batch axis can be sharded across v7x's 2 TensorCores.
    br = min(block_rows, _round_up(-(-b16 // min_grid_steps), 16))
    br = max(16, _round_up(br, 16))      # logical rows per tile (mult of 16)
    tm = br // 2                          # packed rows per tile (mult of 8)
    grid = pl.cdiv(R, tm)

    def const(i):  # weights: same block every grid step -> fetched once
        return (0, 0)

    # Advisory cost estimate (per packed row: three matmuls on the duplicated
    # weights) so XLA schedules the surrounding reshape/slice sensibly.
    flops = 2 * R * (2 * IN_FEATURES * 2 * HIDDEN1
                     + 2 * HIDDEN1 * 2 * HIDDEN2
                     + 2 * HIDDEN2 * 2 * NUM_CLASSES)
    weight_bytes = sum(int(v.size) * v.dtype.itemsize for v in packed.values())
    bytes_accessed = (R * 2 * IN_FEATURES * 4            # input read (f32)
                      + R * 2 * NUM_CLASSES * jnp.dtype(out_dtype).itemsize
                      + weight_bytes)

    out_paired = pl.pallas_call(
        fcnn_kernel,
        out_shape=jax.ShapeDtypeStruct((R, 2 * NUM_CLASSES), out_dtype),
        grid=(grid,),
        in_specs=[
            pl.BlockSpec((tm, 2 * IN_FEATURES), lambda i: (i, 0)),
            pl.BlockSpec(packed["w1"].shape, const),
            pl.BlockSpec(packed["b1"].shape, const),
            pl.BlockSpec(packed["w2"].shape, const),
            pl.BlockSpec(packed["b2"].shape, const),
            pl.BlockSpec(packed["w3"].shape, const),
            pl.BlockSpec(packed["b3"].shape, const),
        ],
        out_specs=pl.BlockSpec((tm, 2 * NUM_CLASSES), lambda i: (i, 0)),
        compiler_params=pltpu.CompilerParams(
            dimension_semantics=("parallel",),
            vmem_limit_bytes=32 * 1024 * 1024),
        cost_estimate=pl.CostEstimate(flops=flops, transcendentals=0,
                                      bytes_accessed=bytes_accessed),
    )(xp, packed["w1"], packed["b1"], packed["w2"], packed["b2"],
      packed["w3"], packed["b3"])

    # Unpack: [R, 128] -> [b16, 64] (free view), drop padding rows.
    return out_paired.reshape(b16, NUM_CLASSES)[:B]


# -----------------------------------------------------------------------------
# Parameters
# -----------------------------------------------------------------------------
def make_params(key):
    """Raw (un-folded) parameters mirroring the PyTorch module (eval mode).

    Linear weights stored as [in, out] (so forward is x @ W + b, equivalent to
    PyTorch x @ W.T + b with W of shape [out, in]).
    """
    ks = jax.random.split(key, 16)

    def linear(kw, kb, fan_in, fan_out):
        bound = 1.0 / jnp.sqrt(fan_in)
        w = jax.random.uniform(kw, (fan_in, fan_out), jnp.float32, -bound, bound)
        b = jax.random.uniform(kb, (1, fan_out), jnp.float32, -bound, bound)
        return w, b

    def bn(kg, kb, km, kv, feat):
        gamma = 1.0 + 0.1 * jax.random.normal(kg, (1, feat), jnp.float32)
        beta = 0.1 * jax.random.normal(kb, (1, feat), jnp.float32)
        rmean = 0.1 * jax.random.normal(km, (1, feat), jnp.float32)
        rvar = jnp.abs(1.0 + 0.1 * jax.random.normal(kv, (1, feat), jnp.float32))
        return gamma, beta, rmean, rvar

    w1, b1 = linear(ks[0], ks[1], IN_FEATURES, HIDDEN1)
    g1, be1, m1, v1 = bn(ks[2], ks[3], ks[4], ks[5], HIDDEN1)
    w2, b2 = linear(ks[6], ks[7], HIDDEN1, HIDDEN2)
    g2, be2, m2, v2 = bn(ks[8], ks[9], ks[10], ks[11], HIDDEN2)
    w3, b3 = linear(ks[12], ks[13], HIDDEN2, NUM_CLASSES)

    return dict(w1=w1, b1=b1, g1=g1, be1=be1, m1=m1, v1=v1,
                w2=w2, b2=b2, g2=g2, be2=be2, m2=m2, v2=v2,
                w3=w3, b3=b3)


def _block_diag2(w):
    k, n = w.shape
    z = jnp.zeros((k, n), w.dtype)
    return jnp.concatenate(
        [jnp.concatenate([w, z], axis=1),
         jnp.concatenate([z, w], axis=1)], axis=0)


def fold_and_pack(p):
    """Fold BatchNorm into the Linears (f32), 2-row-pack, cast weights to bf16."""
    s1 = p["g1"] / jnp.sqrt(p["v1"] + EPS)
    t1 = p["be1"] - p["m1"] * s1
    s2 = p["g2"] / jnp.sqrt(p["v2"] + EPS)
    t2 = p["be2"] - p["m2"] * s2

    w1f, b1f = p["w1"] * s1, p["b1"] * s1 + t1          # (7,128), (1,128)
    w2f, b2f = p["w2"] * s2, p["b2"] * s2 + t2          # (128,64), (1,64)
    w3f, b3f = p["w3"], p["b3"]                          # (64,64), (1,64)

    bf16 = jnp.bfloat16
    return dict(
        w1=_block_diag2(w1f).astype(bf16),               # (14, 256) bf16
        b1=jnp.concatenate([b1f, b1f], axis=1),          # (1, 256)  f32
        w2=_block_diag2(w2f).astype(bf16),               # (256, 128) bf16
        b2=jnp.concatenate([b2f, b2f], axis=1),          # (1, 128)  f32
        w3=_block_diag2(w3f).astype(bf16),               # (128, 128) bf16
        b3=jnp.concatenate([b3f, b3f], axis=1),          # (1, 128)  f32
    )


def fcnn_reference(x, p):
    """Pure-JAX f32 reference (HIGHEST matmul precision) on raw parameters."""
    hp = jax.lax.Precision.HIGHEST
    h = jnp.dot(x, p["w1"], precision=hp) + p["b1"]
    h = (h - p["m1"]) / jnp.sqrt(p["v1"] + EPS) * p["g1"] + p["be1"]
    h = jnp.maximum(h, 0.0)
    h = jnp.dot(h, p["w2"], precision=hp) + p["b2"]
    h = (h - p["m2"]) / jnp.sqrt(p["v2"] + EPS) * p["g2"] + p["be2"]
    h = jnp.maximum(h, 0.0)
    return jnp.dot(h, p["w3"], precision=hp) + p["b3"]


if __name__ == "__main__":
    key = jax.random.PRNGKey(0)
    k_param, k_x1, k_x2 = jax.random.split(key, 3)

    raw = make_params(k_param)
    packed = fold_and_pack(raw)

    # Tolerance accounts for the bf16 matmuls / bf16 output vs. f32 reference
    # (and the different op grouping from BN folding).
    ATOL = RTOL = 3e-2

    # --- Small batch (single grid step) ---
    B1 = 8  # input feature dim = 7 per nn.Linear(7, 128)
    x1 = jax.random.normal(k_x1, (B1, IN_FEATURES), jnp.float32)
    out1 = jax.block_until_ready(fcnn_forward(x1, packed))
    ref1 = fcnn_reference(x1, raw)
    assert out1.shape == (B1, NUM_CLASSES)
    assert jnp.allclose(out1.astype(jnp.float32), ref1, atol=ATOL, rtol=RTOL), \
        "mismatch vs reference (B=8)"

    # --- Larger batch: exercises multi-step grid and the ragged last block ---
    B2 = 200
    x2 = jax.random.normal(k_x2, (B2, IN_FEATURES), jnp.float32)
    out2 = jax.block_until_ready(fcnn_forward(x2, packed))
    ref2 = fcnn_reference(x2, raw)
    assert out2.shape == (B2, NUM_CLASSES)
    assert jnp.allclose(out2.astype(jnp.float32), ref2, atol=ATOL, rtol=RTOL), \
        "mismatch vs reference (B=200)"

    print("KERNEL_OK")
</pallas_src>

<mosaic_0001>
module attributes {stable_mosaic.version = 11 : i64} {
  func.func @fcnn_kernel(%arg0: i32, %arg1: memref<8x14xf32, #tpu.memory_space<vmem>>, %arg2: memref<14x256xbf16, #tpu.memory_space<vmem>>, %arg3: memref<1x256xf32, #tpu.memory_space<vmem>>, %arg4: memref<256x128xbf16, #tpu.memory_space<vmem>>, %arg5: memref<1x128xf32, #tpu.memory_space<vmem>>, %arg6: memref<128x128xbf16, #tpu.memory_space<vmem>>, %arg7: memref<1x128xf32, #tpu.memory_space<vmem>>, %arg8: memref<8x128xbf16, #tpu.memory_space<vmem>>) attributes {dimension_semantics = [#tpu.dimension_semantics<parallel>], iteration_bounds = array<i64: 1>, scalar_prefetch = 0 : i64, scratch_operands = 0 : i64, tpu.core_type = #tpu.core_type<tc>, window_params = [{transform_indices = @transform_0, window_bounds = array<i64: 8, 14>}, {pipeline_mode = #tpu.pipeline_mode<synchronous>, transform_indices = @transform_1, window_bounds = array<i64: 14, 256>}, {pipeline_mode = #tpu.pipeline_mode<synchronous>, transform_indices = @transform_2, window_bounds = array<i64: 1, 256>}, {pipeline_mode = #tpu.pipeline_mode<synchronous>, transform_indices = @transform_3, window_bounds = array<i64: 256, 128>}, {pipeline_mode = #tpu.pipeline_mode<synchronous>, transform_indices = @transform_4, window_bounds = array<i64: 1, 128>}, {pipeline_mode = #tpu.pipeline_mode<synchronous>, transform_indices = @transform_5, window_bounds = array<i64: 128, 128>}, {pipeline_mode = #tpu.pipeline_mode<synchronous>, transform_indices = @transform_6, window_bounds = array<i64: 1, 128>}, {transform_indices = @transform_7, window_bounds = array<i64: 8, 128>}]} {
    %c0 = arith.constant 0 : index
    %c0_0 = arith.constant 0 : index
    %0 = vector.load %arg1[%c0, %c0_0] : memref<8x14xf32, #tpu.memory_space<vmem>>, vector<8x14xf32>
    %1 = arith.truncf %0 : vector<8x14xf32> to vector<8x14xbf16>
    %c0_1 = arith.constant 0 : index
    %c0_2 = arith.constant 0 : index
    %2 = vector.load %arg2[%c0_1, %c0_2] : memref<14x256xbf16, #tpu.memory_space<vmem>>, vector<14x256xbf16>
    %cst = arith.constant dense<0.000000e+00> : vector<8x256xf32>
    %3 = tpu.matmul %1, %2, %cst {dimension_numbers = #tpu.dot_dimension_numbers<[1], [0], [0], [1], [0, 0, 1, 1], [], []>} : vector<8x14xbf16>, vector<14x256xbf16>, vector<8x256xf32> -> vector<8x256xf32>
    %c0_3 = arith.constant 0 : index
    %c0_4 = arith.constant 0 : index
    %4 = vector.load %arg3[%c0_3, %c0_4] : memref<1x256xf32, #tpu.memory_space<vmem>>, vector<1x256xf32>
    %5 = vector.broadcast %4 : vector<1x256xf32> to vector<8x256xf32>
    %6 = arith.addf %3, %5 : vector<8x256xf32>
    %cst_5 = arith.constant 0.000000e+00 : f32
    %7 = vector.broadcast %cst_5 : f32 to vector<8x256xf32>
    %8 = arith.maximumf %6, %7 : vector<8x256xf32>
    %9 = arith.truncf %8 : vector<8x256xf32> to vector<8x256xbf16>
    %c0_6 = arith.constant 0 : index
    %c0_7 = arith.constant 0 : index
    %10 = vector.load %arg4[%c0_6, %c0_7] : memref<256x128xbf16, #tpu.memory_space<vmem>>, vector<256x128xbf16>
    %cst_8 = arith.constant dense<0.000000e+00> : vector<8x128xf32>
    %11 = tpu.matmul %9, %10, %cst_8 {dimension_numbers = #tpu.dot_dimension_numbers<[1], [0], [0], [1], [0, 0, 1, 1], [], []>} : vector<8x256xbf16>, vector<256x128xbf16>, vector<8x128xf32> -> vector<8x128xf32>
    %c0_9 = arith.constant 0 : index
    %c0_10 = arith.constant 0 : index
    %12 = vector.load %arg5[%c0_9, %c0_10] : memref<1x128xf32, #tpu.memory_space<vmem>>, vector<1x128xf32>
    %13 = vector.broadcast %12 : vector<1x128xf32> to vector<8x128xf32>
    %14 = arith.addf %11, %13 : vector<8x128xf32>
    %cst_11 = arith.constant 0.000000e+00 : f32
    %15 = vector.broadcast %cst_11 : f32 to vector<8x128xf32>
    %16 = arith.maximumf %14, %15 : vector<8x128xf32>
    %17 = arith.truncf %16 : vector<8x128xf32> to vector<8x128xbf16>
    %c0_12 = arith.constant 0 : index
    %c0_13 = arith.constant 0 : index
    %18 = vector.load %arg6[%c0_12, %c0_13] : memref<128x128xbf16, #tpu.memory_space<vmem>>, vector<128x128xbf16>
    %cst_14 = arith.constant dense<0.000000e+00> : vector<8x128xf32>
    %19 = tpu.matmul %17, %18, %cst_14 {dimension_numbers = #tpu.dot_dimension_numbers<[1], [0], [0], [1], [0, 0, 1, 1], [], []>} : vector<8x128xbf16>, vector<128x128xbf16>, vector<8x128xf32> -> vector<8x128xf32>
    %c0_15 = arith.constant 0 : index
    %c0_16 = arith.constant 0 : index
    %20 = vector.load %arg7[%c0_15, %c0_16] : memref<1x128xf32, #tpu.memory_space<vmem>>, vector<1x128xf32>
    %21 = vector.broadcast %20 : vector<1x128xf32> to vector<8x128xf32>
    %22 = arith.addf %19, %21 : vector<8x128xf32>
    %23 = arith.truncf %22 : vector<8x128xf32> to vector<8x128xbf16>
    %c0_17 = arith.constant 0 : index
    %c0_18 = arith.constant 0 : index
    %24 = vector.load %arg8[%c0_17, %c0_18] : memref<8x128xbf16, #tpu.memory_space<vmem>>, vector<8x128xbf16>
    tpu.vector_store %arg8[%c0_17, %c0_18], %23 {strides = array<i32>} : memref<8x128xbf16, #tpu.memory_space<vmem>>, vector<8x128xbf16>,
    return
  }
  func.func @transform_0(%arg0: i32) -> (i32, i32) {
    %c0_i32 = arith.constant 0 : i32
    %c0_i32_0 = arith.constant 0 : i32
    return %arg0, %c0_i32 : i32, i32
  }
  func.func @transform_1(%arg0: i32) -> (i32, i32) {
    %c0_i32 = arith.constant 0 : i32
    %c0_i32_0 = arith.constant 0 : i32
    %c0_i32_1 = arith.constant 0 : i32
    return %c0_i32, %c0_i32_0 : i32, i32
  }
  func.func @transform_2(%arg0: i32) -> (i32, i32) {
    %c0_i32 = arith.constant 0 : i32
    %c0_i32_0 = arith.constant 0 : i32
    %c0_i32_1 = arith.constant 0 : i32
    return %c0_i32, %c0_i32_0 : i32, i32
  }
  func.func @transform_3(%arg0: i32) -> (i32, i32) {
    %c0_i32 = arith.constant 0 : i32
    %c0_i32_0 = arith.constant 0 : i32
    %c0_i32_1 = arith.constant 0 : i32
    return %c0_i32, %c0_i32_0 : i32, i32
  }
  func.func @transform_4(%arg0: i32) -> (i32, i32) {
    %c0_i32 = arith.constant 0 : i32
    %c0_i32_0 = arith.constant 0 : i32
    %c0_i32_1 = arith.constant 0 : i32
    return %c0_i32, %c0_i32_0 : i32, i32
  }
  func.func @transform_5(%arg0: i32) -> (i32, i32) {
    %c0_i32 = arith.constant 0 : i32
    %c0_i32_0 = arith.constant 0 : i32
    %c0_i32_1 = arith.constant 0 : i32
    return %c0_i32, %c0_i32_0 : i32, i32
  }
  func.func @transform_6(%arg0: i32) -> (i32, i32) {
    %c0_i32 = arith.constant 0 : i32
    %c0_i32_0 = arith.constant 0 : i32
    %c0_i32_1 = arith.constant 0 : i32
    return %c0_i32, %c0_i32_0 : i32, i32
  }
  func.func @transform_7(%arg0: i32) -> (i32, i32) {
    %c0_i32 = arith.constant 0 : i32
    %c0_i32_0 = arith.constant 0 : i32
    return %arg0, %c0_i32 : i32, i32
  }
}

</mosaic_0001>

<llo_original>
// kernel: tpu_custom_call.1
$region0: #{tpu_custom_call.1}
  #allocation0 [shape = 'u32[]', space=smem, size = 0x4, offset = 0x4, fixed_abs, tag = 'smem constant byte address 0x4 - core index']
  #allocation1 [shape = 'u32[144,128]{1,0:T(1,128)}', space=vmem, size = 0x12000, scoped, tag = 'internal scratch']
  %s0 = inlined_call_operand.hbm [shape: f32[8,14], index: 0, kind: input, shape index: {}]
  %s1 = inlined_call_operand.hbm [shape: bf16[14,256], index: 1, kind: input, shape index: {}]
  %s2 = inlined_call_operand.vmem [shape: f32[1,256], index: 2, kind: input, shape index: {}]
  %s3 = inlined_call_operand.hbm [shape: bf16[256,128], index: 3, kind: input, shape index: {}]
  %s4 = inlined_call_operand.vmem [shape: f32[1,128], index: 4, kind: input, shape index: {}]
  %s5 = inlined_call_operand.hbm [shape: bf16[128,128], index: 5, kind: input, shape index: {}]
  %s6 = inlined_call_operand.vmem [shape: f32[1,128], index: 6, kind: input, shape index: {}]
  %s7 = inlined_call_operand.hbm [shape: bf16[8,128], index: 7, kind: output, shape index: {}]
  %s8 = sld [smem:[#allocation0]]
  $region54: #{tpu_custom_call.1} parent=0
    _
  %s10 = ssub.s32 1, %s8
  %s11 = scalar_select 0, %s10, %s8
  $region1: #{tpu_custom_call.1} parent=0
    #allocation2 [shape = 'u8[4096]{0}', space=vmem, size = 0x1000, scoped, tag = 'input window, operand 0, single buffered']
    #allocation3 [shape = 's32[1]{0}', space=sflag, size = 0x4, scoped, tag = 'scoped memory for tpu_custom_call.1']
    #allocation4 [shape = 's32[1]{0}', space=sflag, size = 0x4, scoped, tag = 'scoped memory for tpu_custom_call.1']
    #allocation5 [shape = 'u8[8192]{0}', space=vmem, size = 0x2000, scoped, tag = 'input window, operand 1, single buffered']
    #allocation6 [shape = 's32[1]{0}', space=sflag, size = 0x4, scoped, tag = 'scoped memory for tpu_custom_call.1']
    #allocation7 [shape = 'u8[65536]{0}', space=vmem, size = 0x10000, scoped, tag = 'input window, operand 3, single buffered']
    #allocation8 [shape = 'u8[32768]{0}', space=vmem, size = 0x8000, scoped, tag = 'input window, operand 5, single buffered']
    #allocation9 [shape = 's32[1]{0}', space=sflag, size = 0x4, scoped, tag = 'scoped memory for tpu_custom_call.1']
    #allocation10 [shape = 'u8[2048]{0}', space=vmem, size = 0x800, scoped, tag = 'output window, operand 0, single buffered']
    %12 = vsyncpa [#allocation3], 0
    %13 = vsyncpa [#allocation6], 0
    %14 = vsyncpa [#allocation9], 0
    %15 = vsyncpa [#allocation4], 0
    // Predicated region
    $region2: #{tpu_custom_call.1} parent=1 // pred_check
      _
    $region3: #{tpu_custom_call.1} parent=1 // pred_check_branch
      %17 = sbr.rel (0) target = $region5
    $region4: #{tpu_custom_call.1} parent=1 // pred_region
      %s19 = ssub.s32 128, 128
      %20 = vsyncadd [#allocation3], %s19
      %s22 = sshll.u32 [#allocation2], 4
      %s23 = int_to_ptr.vmem [resolvable:$true] %s22
      %25 = dma.hbm_to_vmem [thread:$0]  %s0, 128, %s23, [#allocation3]
    $region5: #{tpu_custom_call.1} parent=1 // pred_fallthru
      _
    // Predicated region
    $region6: #{tpu_custom_call.1} parent=1 // pred_check
      _
    $region7: #{tpu_custom_call.1} parent=1 // pred_check_branch
      %27 = sbr.rel (0) target = $region9
    $region8: #{tpu_custom_call.1} parent=1 // pred_region
      %s29 = ssub.s32 256, 256
      %30 = vsyncadd [#allocation6], %s29
      %s31 = sshll.u32 [#allocation5], 4
      %s32 = int_to_ptr.vmem [resolvable:$true] %s31
      %37 = dma.hbm_to_vmem [thread:$0]  %s1, 256, %s32, [#allocation6], 128, 128, 8
    $region9: #{tpu_custom_call.1} parent=1 // pred_fallthru
      _
    // Predicated region
    $region10: #{tpu_custom_call.1} parent=1 // pred_check
      _
    $region11: #{tpu_custom_call.1} parent=1 // pred_check_branch
      %39 = sbr.rel (0) target = $region13
    $region12: #{tpu_custom_call.1} parent=1 // pred_region
      _
    $region13: #{tpu_custom_call.1} parent=1 // pred_fallthru
      _
    // Predicated region
    $region14: #{tpu_custom_call.1} parent=1 // pred_check
      _
    $region15: #{tpu_custom_call.1} parent=1 // pred_check_branch
      %41 = sbr.rel (0) target = $region17
    $region16: #{tpu_custom_call.1} parent=1 // pred_region
      %s43 = ssub.s32 2048, 2048
      %44 = vsyncadd [#allocation6], %s43
      %s45 = sshll.u32 [#allocation7], 4
      %s46 = int_to_ptr.vmem [resolvable:$true] %s45
      %51 = dma.hbm_to_vmem [thread:$0]  %s3, 2048, %s46, [#allocation6], 64, 64, 4
    $region17: #{tpu_custom_call.1} parent=1 // pred_fallthru
      _
    // Predicated region
    $region18: #{tpu_custom_call.1} parent=1 // pred_check
      _
    $region19: #{tpu_custom_call.1} parent=1 // pred_check_branch
      %53 = sbr.rel (0) target = $region21
    $region20: #{tpu_custom_call.1} parent=1 // pred_region
      _
    $region21: #{tpu_custom_call.1} parent=1 // pred_fallthru
      _
    // Predicated region
    $region22: #{tpu_custom_call.1} parent=1 // pred_check
      _
    $region23: #{tpu_custom_call.1} parent=1 // pred_check_branch
      %55 = sbr.rel (0) target = $region25
    $region24: #{tpu_custom_call.1} parent=1 // pred_region
      %s57 = ssub.s32 1024, 1024
      %58 = vsyncadd [#allocation9], %s57
      %s59 = sshll.u32 [#allocation8], 4
      %s60 = int_to_ptr.vmem [resolvable:$true] %s59
      %65 = dma.hbm_to_vmem [thread:$0]  %s5, 1024, %s60, [#allocation9], 64, 64, 4
    $region25: #{tpu_custom_call.1} parent=1 // pred_fallthru
      _
    // Predicated region
    $region26: #{tpu_custom_call.1} parent=1 // pred_check
      _
    $region27: #{tpu_custom_call.1} parent=1 // pred_check_branch
      %67 = sbr.rel (0) target = $region29
    $region28: #{tpu_custom_call.1} parent=1 // pred_region
      _
    $region29: #{tpu_custom_call.1} parent=1 // pred_fallthru
      _
    // Predicated region
    $region30: #{tpu_custom_call.1} parent=1 // pred_check
      _
    $region31: #{tpu_custom_call.1} parent=1 // pred_check_branch
      %69 = sbr.rel (0) target = $region33
    $region32: #{tpu_custom_call.1} parent=1 // pred_region
      %70 = dma.done [#allocation3], 128
    $region33: #{tpu_custom_call.1} parent=1 // pred_fallthru
      _
    // Predicated region
    $region34: #{tpu_custom_call.1} parent=1 // pred_check
      _
    $region35: #{tpu_custom_call.1} parent=1 // pred_check_branch
      %72 = sbr.rel (0) target = $region37
    $region36: #{tpu_custom_call.1} parent=1 // pred_region
      %73 = dma.done [#allocation6], 256
    $region37: #{tpu_custom_call.1} parent=1 // pred_fallthru
      _
    // Predicated region
    $region38: #{tpu_custom_call.1} parent=1 // pred_check
      _
    $region39: #{tpu_custom_call.1} parent=1 // pred_check_branch
      %75 = sbr.rel (0) target = $region41
    $region40: #{tpu_custom_call.1} parent=1 // pred_region
      %76 = dma.done [#allocation6], 2048
    $region41: #{tpu_custom_call.1} parent=1 // pred_fallthru
      _
    // Predicated region
    $region42: #{tpu_custom_call.1} parent=1 // pred_check
      _
    $region43: #{tpu_custom_call.1} parent=1 // pred_check_branch
      %78 = sbr.rel (0) target = $region45
    $region44: #{tpu_custom_call.1} parent=1 // pred_region
      %79 = dma.done [#allocation9], 1024
    $region45: #{tpu_custom_call.1} parent=1 // pred_fallthru
      _
    %v81 = vld [vmem:[#allocation2] sm:$0xff]
    %v82 = vpack.c.bf16 %v81, %v81
    %v83 = vld [vmem:[#allocation5] sm:$0xff]
    %v84 = vld [vmem:[#allocation5 + $0x8] sm:$0x77]
    %v85 = vld [vmem:[%s2] sm:$0x3]
    %v87 = vlaneseq
    %v88 = vshrl.u32 %v87, 7
    %v89 = vsub.s32 0, %v88
    %v90 = vrot.slane %v85, %v89
    %v91 = vlaneseq
    %v92 = vshrl.u32 %v91, 7
    %v93 = vsub.s32 1, %v92
    %v94 = vrot.slane %v85, %v93
    %v99 = vunpack.c.l.b16 %v83
    %v100 = vunpack.c.h.b16 %v83
    %v101 = vunpack.c.l.b16 %v84
    %v102 = vunpack.c.h.b16 %v84
    %v103 = vpack.c.b16 %v101, %v99
    %v104 = vpack.c.b16 %v102, %v100
    %vm105 = vcmask 113664
    %v107 = vsel %vm105, %v82, 0
    %vm109 = vcmask 1046528
    %v111 = vsel %vm109, %v103, 0
    %v114 = vsel %vm109, %v104, 0
    %116 = vmatprep.subr.bf16.mxu0 %v114
    %117 = vmatpush1.bf16.msra.mxu0 %v111
    %118 = vmatprep.subr.bf16.mxu0 0
    %119 = vmatpush1.bf16.msra.mxu0 0
    %120 = vmatprep.subr.bf16.mxu0 0
    %121 = vmatpush1.bf16.msra.mxu0 0
    %122 = vmatprep.subr.bf16.mxu0 0
    %123 = vmatpush1.bf16.msra.mxu0 0
    %124 = vmatprep.subr.bf16.mxu0 0
    %125 = vmatpush1.bf16.msra.mxu0 0
    %126 = vmatprep.subr.bf16.mxu0 0
    %127 = vmatpush1.bf16.msra.mxu0 0
    %128 = vmatprep.subr.bf16.mxu0 0
    %129 = vmatpush1.bf16.msra.mxu0 0
    %130 = vmatprep.subr.bf16.mxu0 0
    %131 = vmatpush1.bf16.msra.mxu0 0
    %132 = vmatprep.subr.bf16.mxu0 0
    %133 = vmatpush1.bf16.msra.mxu0 0
    %134 = vmatprep.subr.bf16.mxu0 0
    %135 = vmatpush1.bf16.msra.mxu0 0
    %136 = vmatprep.subr.bf16.mxu0 0
    %137 = vmatpush1.bf16.msra.mxu0 0
    %138 = vmatprep.subr.bf16.mxu0 0
    %139 = vmatpush1.bf16.msra.mxu0 0
    %140 = vmatprep.subr.bf16.mxu0 0
    %141 = vmatpush1.bf16.msra.mxu0 0
    %142 = vmatprep.subr.bf16.mxu0 0
    %143 = vmatpush1.bf16.msra.mxu0 0
    %144 = vmatprep.subr.bf16.mxu0 0
    %145 = vmatpush1.bf16.msra.mxu0 0
    %146 = vmatprep.subr.bf16.mxu0 0
    %147 = vmatpush1.bf16.msra.mxu0 0
    %148 = vmatprep.mubr.bf16.mxu0 0
    %149 = vmatmul.mubr.bf16.gmra.mrb[0].mxu0 %v107
    %v150 = vpop.f32.mrb[0].mxu0
    %v151 = vadd.f32 %v90, %v150
    %v152 = vpop.f32.mrb[0].mxu0
    %v153 = vadd.f32 %v94, %v152
    %v154 = vpop.f32.mrb[0].mxu0
    %v155 = vpop.f32.mrb[0].mxu0
    %156 = vdwg.mxu0
    %v157 = vmax.f32 %v151, 0.0
    %v158 = vmax.f32 %v153, 0.0
    %v159 = vpack.c.bf16 %v157, %v157
    %v160 = vpack.c.bf16 %v158, %v158
    %v161 = vld [vmem:[#allocation7] sm:$0xf]
    %v162 = vld [vmem:[#allocation7 + $0x4] sm:$0xf]
    %v163 = vld [vmem:[#allocation7 + $0x8] sm:$0xf]
    %v164 = vld [vmem:[#allocation7 + $0xc] sm:$0xf]
    %v165 = vld [vmem:[#allocation7 + $0x10] sm:$0xf]
    %v166 = vld [vmem:[#allocation7 + $0x14] sm:$0xf]
    %v167 = vld [vmem:[#allocation7 + $0x18] sm:$0xf]
    %v168 = vld [vmem:[#allocation7 + $0x1c] sm:$0xf]
    %v169 = vld [vmem:[#allocation7 + $0x20] sm:$0xf]
    %v170 = vld [vmem:[#allocation7 + $0x24] sm:$0xf]
    %v171 = vld [vmem:[#allocation7 + $0x28] sm:$0xf]
    %v172 = vld [vmem:[#allocation7 + $0x2c] sm:$0xf]
    %v173 = vld [vmem:[#allocation7 + $0x30] sm:$0xf]
    %v174 = vld [vmem:[#allocation7 + $0x34] sm:$0xf]
    %v175 = vld [vmem:[#allocation7 + $0x38] sm:$0xf]
    %v176 = vld [vmem:[#allocation7 + $0x3c] sm:$0xf]
    %v177 = vld [vmem:[#allocation7 + $0x40] sm:$0xf]
    %v178 = vld [vmem:[#allocation7 + $0x44] sm:$0xf]
    %v179 = vld [vmem:[#allocation7 + $0x48] sm:$0xf]
    %v180 = vld [vmem:[#allocation7 + $0x4c] sm:$0xf]
    %v181 = vld [vmem:[#allocation7 + $0x50] sm:$0xf]
    %v182 = vld [vmem:[#allocation7 + $0x54] sm:$0xf]
    %v183 = vld [vmem:[#allocation7 + $0x58] sm:$0xf]
    %v184 = vld [vmem:[#allocation7 + $0x5c] sm:$0xf]
    %v185 = vld [vmem:[#allocation7 + $0x60] sm:$0xf]
    %v186 = vld [vmem:[#allocation7 + $0x64] sm:$0xf]
    %v187 = vld [vmem:[#allocation7 + $0x68] sm:$0xf]
    %v188 = vld [vmem:[#allocation7 + $0x6c] sm:$0xf]
    %v189 = vld [vmem:[#allocation7 + $0x70] sm:$0xf]
    %v190 = vld [vmem:[#allocation7 + $0x74] sm:$0xf]
    %v191 = vld [vmem:[#allocation7 + $0x78] sm:$0xf]
    %v192 = vld [vmem:[#allocation7 + $0x7c] sm:$0xf]
    %v193 = vld [vmem:[%s4] sm:$0x1]
    %v195 = vlaneseq
    %v196 = vshrl.u32 %v195, 7
    %v197 = vsub.s32 0, %v196
    %v198 = vrot.slane %v193, %v197
    %v232 = vunpack.c.l.b16 %v161
    %v233 = vunpack.c.l.b16 %v162
    %v234 = vunpack.c.l.b16 %v163
    %v235 = vunpack.c.l.b16 %v164
    %v236 = vunpack.c.l.b16 %v165
    %v237 = vunpack.c.l.b16 %v166
    %v238 = vunpack.c.l.b16 %v167
    %v239 = vunpack.c.l.b16 %v168
    %v240 = vunpack.c.l.b16 %v169
    %v241 = vunpack.c.l.b16 %v170
    %v242 = vunpack.c.l.b16 %v171
    %v243 = vunpack.c.l.b16 %v172
    %v244 = vunpack.c.l.b16 %v173
    %v245 = vunpack.c.l.b16 %v174
    %v246 = vunpack.c.l.b16 %v175
    %v247 = vunpack.c.l.b16 %v176
    %v248 = vunpack.c.l.b16 %v177
    %v249 = vunpack.c.l.b16 %v178
    %v250 = vunpack.c.l.b16 %v179
    %v251 = vunpack.c.l.b16 %v180
    %v252 = vunpack.c.l.b16 %v181
    %v253 = vunpack.c.l.b16 %v182
    %v254 = vunpack.c.l.b16 %v183
    %v255 = vunpack.c.l.b16 %v184
    %v256 = vunpack.c.l.b16 %v185
    %v257 = vunpack.c.l.b16 %v186
    %v258 = vunpack.c.l.b16 %v187
    %v259 = vunpack.c.l.b16 %v188
    %v260 = vunpack.c.l.b16 %v189
    %v261 = vunpack.c.l.b16 %v190
    %v262 = vunpack.c.l.b16 %v191
    %v263 = vunpack.c.l.b16 %v192
    %v264 = vpack.c.b16 %v233, %v232
    %v265 = vpack.c.b16 %v235, %v234
    %v266 = vpack.c.b16 %v237, %v236
    %v267 = vpack.c.b16 %v239, %v238
    %v268 = vpack.c.b16 %v241, %v240
    %v269 = vpack.c.b16 %v243, %v242
    %v270 = vpack.c.b16 %v245, %v244
    %v271 = vpack.c.b16 %v247, %v246
    %v272 = vpack.c.b16 %v249, %v248
    %v273 = vpack.c.b16 %v251, %v250
    %v274 = vpack.c.b16 %v253, %v252
    %v275 = vpack.c.b16 %v255, %v254
    %v276 = vpack.c.b16 %v257, %v256
    %v277 = vpack.c.b16 %v259, %v258
    %v278 = vpack.c.b16 %v261, %v260
    %v279 = vpack.c.b16 %v263, %v262
    %296 = vmatprep.subr.bf16.mxu0 0
    %297 = vmatpush1.bf16.msra.mxu0 %v264
    %298 = vmatprep.subr.bf16.mxu0 0
    %299 = vmatpush1.bf16.msra.mxu0 %v265
    %300 = vmatprep.subr.bf16.mxu0 0
    %301 = vmatpush1.bf16.msra.mxu0 %v266
    %302 = vmatprep.subr.bf16.mxu0 0
    %303 = vmatpush1.bf16.msra.mxu0 %v267
    %304 = vmatprep.subr.bf16.mxu0 0
    %305 = vmatpush1.bf16.msra.mxu0 %v268
    %306 = vmatprep.subr.bf16.mxu0 0
    %307 = vmatpush1.bf16.msra.mxu0 %v269
    %308 = vmatprep.subr.bf16.mxu0 0
    %309 = vmatpush1.bf16.msra.mxu0 %v270
    %310 = vmatprep.subr.bf16.mxu0 0
    %311 = vmatpush1.bf16.msra.mxu0 %v271
    %312 = vmatprep.subr.bf16.mxu0 0
    %313 = vmatpush1.bf16.msra.mxu0 %v272
    %314 = vmatprep.subr.bf16.mxu0 0
    %315 = vmatpush1.bf16.msra.mxu0 %v273
    %316 = vmatprep.subr.bf16.mxu0 0
    %317 = vmatpush1.bf16.msra.mxu0 %v274
    %318 = vmatprep.subr.bf16.mxu0 0
    %319 = vmatpush1.bf16.msra.mxu0 %v275
    %320 = vmatprep.subr.bf16.mxu0 0
    %321 = vmatpush1.bf16.msra.mxu0 %v276
    %322 = vmatprep.subr.bf16.mxu0 0
    %323 = vmatpush1.bf16.msra.mxu0 %v277
    %324 = vmatprep.subr.bf16.mxu0 0
    %325 = vmatpush1.bf16.msra.mxu0 %v278
    %326 = vmatprep.subr.bf16.mxu0 0
    %327 = vmatpush1.bf16.msra.mxu0 %v279
    %328 = vmatprep.mubr.bf16.mxu0 %v160
    %329 = vmatmul.mubr.bf16.gmra.mrb[0].mxu0 %v159
    %v330 = vpop.f32.mrb[0].mxu0
    %v331 = vadd.f32 %v198, %v330
    %v332 = vpop.f32.mrb[0].mxu0
    %v333 = vpop.f32.mrb[0].mxu0
    %v334 = vpop.f32.mrb[0].mxu0
    %335 = vdwg.mxu0
    %v336 = vmax.f32 %v331, 0.0
    %v337 = vpack.c.bf16 %v336, %v336
    %v338 = vld [vmem:[#allocation8] sm:$0xf]
    %v339 = vld [vmem:[#allocation8 + $0x4] sm:$0xf]
    %v340 = vld [vmem:[#allocation8 + $0x8] sm:$0xf]
    %v341 = vld [vmem:[#allocation8 + $0xc] sm:$0xf]
    %v342 = vld [vmem:[#allocation8 + $0x10] sm:$0xf]
    %v343 = vld [vmem:[#allocation8 + $0x14] sm:$0xf]
    %v344 = vld [vmem:[#allocation8 + $0x18] sm:$0xf]
    %v345 = vld [vmem:[#allocation8 + $0x1c] sm:$0xf]
    %v346 = vld [vmem:[#allocation8 + $0x20] sm:$0xf]
    %v347 = vld [vmem:[#allocation8 + $0x24] sm:$0xf]
    %v348 = vld [vmem:[#allocation8 + $0x28] sm:$0xf]
    %v349 = vld [vmem:[#allocation8 + $0x2c] sm:$0xf]
    %v350 = vld [vmem:[#allocation8 + $0x30] sm:$0xf]
    %v351 = vld [vmem:[#allocation8 + $0x34] sm:$0xf]
    %v352 = vld [vmem:[#allocation8 + $0x38] sm:$0xf]
    %v353 = vld [vmem:[#allocation8 + $0x3c] sm:$0xf]
    %v354 = vld [vmem:[%s6] sm:$0x1]
    %v356 = vlaneseq
    %v357 = vshrl.u32 %v356, 7
    %v358 = vsub.s32 0, %v357
    %v359 = vrot.slane %v354, %v358
    %v377 = vunpack.c.l.b16 %v338
    %v378 = vunpack.c.l.b16 %v339
    %v379 = vunpack.c.l.b16 %v340
    %v380 = vunpack.c.l.b16 %v341
    %v381 = vunpack.c.l.b16 %v342
    %v382 = vunpack.c.l.b16 %v343
    %v383 = vunpack.c.l.b16 %v344
    %v384 = vunpack.c.l.b16 %v345
    %v385 = vunpack.c.l.b16 %v346
    %v386 = vunpack.c.l.b16 %v347
    %v387 = vunpack.c.l.b16 %v348
    %v388 = vunpack.c.l.b16 %v349
    %v389 = vunpack.c.l.b16 %v350
    %v390 = vunpack.c.l.b16 %v351
    %v391 = vunpack.c.l.b16 %v352
    %v392 = vunpack.c.l.b16 %v353
    %v393 = vpack.c.b16 %v378, %v377
    %v394 = vpack.c.b16 %v380, %v379
    %v395 = vpack.c.b16 %v382, %v381
    %v396 = vpack.c.b16 %v384, %v383
    %v397 = vpack.c.b16 %v386, %v385
    %v398 = vpack.c.b16 %v388, %v387
    %v399 = vpack.c.b16 %v390, %v389
    %v400 = vpack.c.b16 %v392, %v391
    %409 = vmatprep.subr.bf16.mxu0 0
    %410 = vmatpush1.bf16.msra.mxu0 %v393
    %411 = vmatprep.subr.bf16.mxu0 0
    %412 = vmatpush1.bf16.msra.mxu0 %v394
    %413 = vmatprep.subr.bf16.mxu0 0
    %414 = vmatpush1.bf16.msra.mxu0 %v395
    %415 = vmatprep.subr.bf16.mxu0 0
    %416 = vmatpush1.bf16.msra.mxu0 %v396
    %417 = vmatprep.subr.bf16.mxu0 0
    %418 = vmatpush1.bf16.msra.mxu0 %v397
    %419 = vmatprep.subr.bf16.mxu0 0
    %420 = vmatpush1.bf16.msra.mxu0 %v398
    %421 = vmatprep.subr.bf16.mxu0 0
    %422 = vmatpush1.bf16.msra.mxu0 %v399
    %423 = vmatprep.subr.bf16.mxu0 0
    %424 = vmatpush1.bf16.msra.mxu0 %v400
    %425 = vmatprep.subr.bf16.mxu0 0
    %426 = vmatpush1.bf16.msra.mxu0 0
    %427 = vmatprep.subr.bf16.mxu0 0
    %428 = vmatpush1.bf16.msra.mxu0 0
    %429 = vmatprep.subr.bf16.mxu0 0
    %430 = vmatpush1.bf16.msra.mxu0 0
    %431 = vmatprep.subr.bf16.mxu0 0
    %432 = vmatpush1.bf16.msra.mxu0 0
    %433 = vmatprep.subr.bf16.mxu0 0
    %434 = vmatpush1.bf16.msra.mxu0 0
    %435 = vmatprep.subr.bf16.mxu0 0
    %436 = vmatpush1.bf16.msra.mxu0 0
    %437 = vmatprep.subr.bf16.mxu0 0
    %438 = vmatpush1.bf16.msra.mxu0 0
    %439 = vmatprep.subr.bf16.mxu0 0
    %440 = vmatpush1.bf16.msra.mxu0 0
    %441 = vmatprep.mubr.bf16.mxu0 0
    %442 = vmatmul.mubr.bf16.gmra.mrb[0].mxu0 %v337
    %v443 = vpop.f32.mrb[0].mxu0
    %v444 = vadd.f32 %v359, %v443
    %v445 = vpop.f32.mrb[0].mxu0
    %v446 = vpop.f32.mrb[0].mxu0
    %v447 = vpop.f32.mrb[0].mxu0
    %448 = vdwg.mxu0
    %v449 = vpack.c.bf16 %v444, %v444
    %450 = vst [vmem:[#allocation10] sm:$0xf] %v449
    // Predicated region
    $region46: #{tpu_custom_call.1} parent=1 // pred_check
      _
    $region47: #{tpu_custom_call.1} parent=1 // pred_check_branch
      %452 = sbr.rel (0) target = $region49
    $region48: #{tpu_custom_call.1} parent=1 // pred_region
      %s454 = ssub.s32 64, 64
      %455 = vsyncadd [#allocation4], %s454
      %s457 = sshll.u32 [#allocation10], 4
      %s458 = int_to_ptr.vmem [resolvable:$true] %s457
      %460 = dma.vmem_to_hbm [thread:$0]  %s458, 64, %s7, [#allocation4]
    $region49: #{tpu_custom_call.1} parent=1 // pred_fallthru
      _
    // Predicated region
    $region50: #{tpu_custom_call.1} parent=1 // pred_check
      _
    $region51: #{tpu_custom_call.1} parent=1 // pred_check_branch
      %462 = sbr.rel (0) target = $region53
    $region52: #{tpu_custom_call.1} parent=1 // pred_region
      %463 = dma.done [#allocation4], 64
    $region53: #{tpu_custom_call.1} parent=1 // pred_fallthru
      _
    %464 = vsyncpa [#allocation3], 1
    %465 = vsyncpa [#allocation6], 1
    %466 = vsyncpa [#allocation9], 1
    %467 = vsyncpa [#allocation4], 1

</llo_original>
